<compile_context>
chip_gen: v7x
topology: tpu7x:2x2x1
jax: 0.10.0
libtpu: 0.0.40
codegen_flags: <defaults>
</compile_context>

<pallas_src>
import functools

import jax
import jax.numpy as jnp
from jax import lax
from jax.experimental import pallas as pl
from jax.experimental.pallas import tpu as pltpu


def _l_tv_kernel(x_ref, out_h_ref, out_w_ref, *, width, hw):
    """One (block_rows, H*W) lane-dense block -> two per-block partial sums."""
    x = x_ref[...].astype(jnp.float32)                     # (Rb, HW)
    col = lax.broadcasted_iota(jnp.int32, x.shape, 1)      # flat index i = h*W + w

    # Horizontal neighbour (w+1): circular lane roll by -1 (== HW-1), then mask
    # out the last column of every image row (w == W-1), where the roll wraps.
    xw = pltpu.roll(x, shift=hw - 1, axis=1)               # xw[i] = x[(i+1) % HW]
    dw = jnp.where(col % width != width - 1, xw - x, 0.0)

    # Vertical neighbour (h+1): circular lane roll by -W (== HW-W), then mask
    # out the last image row (i >= (H-1)*W), where the roll wraps.
    xh = pltpu.roll(x, shift=hw - width, axis=1)           # xh[i] = x[(i+W) % HW]
    dh = jnp.where(col < hw - width, xh - x, 0.0)

    def _sum_all(v):                                       # (Rb, HW) -> (1, 1)
        m = jnp.sum(v, axis=1, keepdims=True)              # lane reduce   -> (Rb, 1)
        return jnp.sum(m, axis=0, keepdims=True)           # sublane reduce -> (1, 1)

    # Store each partial broadcast over an aligned (8, 128) tile; the wrapper
    # reads element [0, 0] of every block.  Keeping the output blocks
    # (8,128)-aligned lets the grid axis stay "parallel" (no carried scalar
    # accumulator) while the store stays an unmasked full-tile vst.
    out_h_ref[0] = jnp.broadcast_to(_sum_all(dh * dh), (8, 128))
    out_w_ref[0] = jnp.broadcast_to(_sum_all(dw * dw), (8, 128))


def l_tv(x, tv_loss_weight=1.0, block_rows=None,
         vmem_block_budget_bytes=None, vmem_limit_bytes=None):
    """Total-variation loss matching the PyTorch L_TV module. Returns a scalar."""
    B, C, H, W = x.shape
    R = B * C
    HW = H * W
    xf = x.reshape(R, HW)                      # lane-dense: lane dim = H*W

    # --- per-generation VMEM budgets ---------------------------------------
    if vmem_limit_bytes is None or vmem_block_budget_bytes is None:
        try:
            vmem_cap = pltpu.get_tpu_info().vmem_capacity_bytes
        except Exception:
            vmem_cap = 64 * 1024 * 1024        # conservative fallback (v7x per-TC)
        if vmem_limit_bytes is None:
            # ~3/4 of physical VMEM, capped at 100 MiB (v5e/v6e ~96-100 MiB,
            # v7x ~48 MiB) -- leaves headroom for Mosaic internal scratch.
            vmem_limit_bytes = int(min(vmem_cap * 3 // 4, 100 * 1024 * 1024))
        if vmem_block_budget_bytes is None:
            vmem_block_budget_bytes = max(vmem_limit_bytes - (4 << 20), 4 << 20)

    # --- pick the row-block size --------------------------------------------
    itemsize = jnp.dtype(x.dtype).itemsize
    # Live bytes per block row: double-buffered input block + ~4x f32
    # intermediates (cast copy, rolled neighbours, masked diffs / squares).
    bytes_per_row = (2 * itemsize + 4 * 4) * HW
    if block_rows is None:
        block_rows = max(1, vmem_block_budget_bytes // bytes_per_row)
    block_rows = int(max(1, min(block_rows, R)))

    if block_rows >= R:
        block_rows = R                         # single block: full-dim block is legal
        r_pad = R
    else:
        block_rows = max(8, (block_rows // 8) * 8)    # sublane-aligned blocks
        r_pad = pl.cdiv(R, block_rows) * block_rows
    num_blocks = r_pad // block_rows
    if r_pad != R:
        # Padded rows are whole flattened images of zeros -> all their diffs are
        # zero, so padding never changes either partial sum.
        xf = jnp.pad(xf, ((0, r_pad - R), (0, 0)))
    # TODO(synk): single images larger than the per-step budget (block_rows=8
    # still too big) need an extra H-stripe grid axis with a 1-row halo.

    kernel = functools.partial(_l_tv_kernel, width=W, hw=HW)

    out_h, out_w = pl.pallas_call(
        kernel,
        out_shape=(jax.ShapeDtypeStruct((num_blocks, 8, 128), jnp.float32),
                   jax.ShapeDtypeStruct((num_blocks, 8, 128), jnp.float32)),
        grid=(num_blocks,),
        in_specs=[pl.BlockSpec((block_rows, HW), lambda g: (g, 0))],
        out_specs=(pl.BlockSpec((1, 8, 128), lambda g: (g, 0, 0)),
                   pl.BlockSpec((1, 8, 128), lambda g: (g, 0, 0))),
        compiler_params=pltpu.CompilerParams(
            # Per-block partials are independent -> the batch axis can be split
            # across both v7x TensorCores; neutral on single-TC v5e/v6e.
            dimension_semantics=("parallel",),
            vmem_limit_bytes=int(vmem_limit_bytes)),
    )(xf)

    h_tv = jnp.sum(out_h[:, 0, 0])
    w_tv = jnp.sum(out_w[:, 0, 0])

    count_h = (H - 1) * W                      # note: H==1 or W==1 divides by zero,
    count_w = H * (W - 1)                      # matching the PyTorch module's behavior.
    return tv_loss_weight * 2.0 * (h_tv / count_h + w_tv / count_w) / B


def _ref_l_tv(x, tv_loss_weight=1.0):
    """Plain-JAX reference replicating the PyTorch module semantics."""
    B, C, H, W = x.shape
    count_h = (H - 1) * W
    count_w = H * (W - 1)
    h_tv = jnp.sum(jnp.square(x[:, :, 1:, :] - x[:, :, :-1, :]))
    w_tv = jnp.sum(jnp.square(x[:, :, :, 1:] - x[:, :, :, :-1]))
    return tv_loss_weight * 2.0 * (h_tv / count_h + w_tv / count_w) / B


if __name__ == "__main__":
    key = jax.random.PRNGKey(0)
    x = jax.random.uniform(key, (2, 4, 16, 16), dtype=jnp.float32)

    out = l_tv(x, tv_loss_weight=1.0)
    out = jax.block_until_ready(out)

    ref = _ref_l_tv(x, tv_loss_weight=1.0)
    assert out.shape == ()
    assert jnp.allclose(out, ref, atol=1e-5, rtol=1e-5), (out, ref)

    print("KERNEL_OK")
</pallas_src>

<mosaic_0001>
module attributes {stable_mosaic.version = 11 : i64} {
  func.func @_l_tv_kernel(%arg0: i32, %arg1: memref<8x256xf32, #tpu.memory_space<vmem>>, %arg2: memref<1x8x128xf32, #tpu.memory_space<vmem>>, %arg3: memref<1x8x128xf32, #tpu.memory_space<vmem>>) attributes {dimension_semantics = [#tpu.dimension_semantics<parallel>], iteration_bounds = array<i64: 1>, scalar_prefetch = 0 : i64, scratch_operands = 0 : i64, tpu.core_type = #tpu.core_type<tc>, window_params = [{transform_indices = @transform_0, window_bounds = array<i64: 8, 256>}, {transform_indices = @transform_1, window_bounds = array<i64: 1, 8, 128>}, {transform_indices = @transform_2, window_bounds = array<i64: 1, 8, 128>}]} {
    %c0 = arith.constant 0 : index
    %c0_0 = arith.constant 0 : index
    %0 = vector.load %arg1[%c0, %c0_0] : memref<8x256xf32, #tpu.memory_space<vmem>>, vector<8x256xf32>
    %1 = tpu.iota {dimensions = array<i32: 1>} : vector<8x256xi32>
    %c255_i32 = arith.constant 255 : i32
    %2 = tpu.dynamic_rotate %0 by %c255_i32 dim 1 : vector<8x256xf32>, i32 -> vector<8x256xf32>
    %c16_i32 = arith.constant 16 : i32
    %c0_i32 = arith.constant 0 : i32
    %3 = arith.cmpi eq, %c16_i32, %c0_i32 : i32
    %c1_i32 = arith.constant 1 : i32
    %4 = arith.select %3, %c1_i32, %c16_i32 : i32
    %5 = vector.broadcast %4 : i32 to vector<8x256xi32>
    %6 = arith.remsi %1, %5 : vector<8x256xi32>
    %c0_i32_1 = arith.constant 0 : i32
    %7 = vector.broadcast %c0_i32_1 : i32 to vector<8x256xi32>
    %8 = arith.cmpi ne, %6, %7 : vector<8x256xi32>
    %c0_i32_2 = arith.constant 0 : i32
    %9 = vector.broadcast %c0_i32_2 : i32 to vector<8x256xi32>
    %10 = arith.cmpi slt, %6, %9 : vector<8x256xi32>
    %c0_i32_3 = arith.constant 0 : i32
    %11 = arith.cmpi slt, %4, %c0_i32_3 : i32
    %12 = vector.broadcast %11 : i1 to vector<8x256xi1>
    %13 = vector.broadcast %12 : vector<8x256xi1> to vector<8x256xi1>
    %14 = arith.xori %10, %13 : vector<8x256xi1>
    %15 = arith.andi %14, %8 : vector<8x256xi1>
    %16 = vector.broadcast %4 : i32 to vector<8x256xi32>
    %17 = arith.addi %6, %16 : vector<8x256xi32>
    %18 = arith.select %15, %17, %6 : vector<8x256xi1>, vector<8x256xi32>
    %c15_i32 = arith.constant 15 : i32
    %19 = vector.broadcast %c15_i32 : i32 to vector<8x256xi32>
    %20 = arith.cmpi ne, %18, %19 : vector<8x256xi32>
    %21 = arith.subf %2, %0 : vector<8x256xf32>
    %cst = arith.constant 0.000000e+00 : f32
    %22 = vector.broadcast %cst : f32 to vector<8x256xf32>
    %23 = arith.select %20, %21, %22 : vector<8x256xi1>, vector<8x256xf32>
    %c240_i32 = arith.constant 240 : i32
    %24 = tpu.dynamic_rotate %0 by %c240_i32 dim 1 : vector<8x256xf32>, i32 -> vector<8x256xf32>
    %c240_i32_4 = arith.constant 240 : i32
    %25 = vector.broadcast %c240_i32_4 : i32 to vector<8x256xi32>
    %26 = arith.cmpi slt, %1, %25 : vector<8x256xi32>
    %27 = arith.subf %24, %0 : vector<8x256xf32>
    %cst_5 = arith.constant 0.000000e+00 : f32
    %28 = vector.broadcast %cst_5 : f32 to vector<8x256xf32>
    %29 = arith.select %26, %27, %28 : vector<8x256xi1>, vector<8x256xf32>
    %30 = arith.mulf %29, %29 : vector<8x256xf32>
    %cst_6 = arith.constant dense<0.000000e+00> : vector<8xf32>
    %31 = vector.multi_reduction <add>, %30, %cst_6 [1] : vector<8x256xf32> to vector<8xf32>
    %32 = vector.shape_cast %31 : vector<8xf32> to vector<8x1xf32>
    %cst_7 = arith.constant dense<0.000000e+00> : vector<1xf32>
    %33 = vector.multi_reduction <add>, %32, %cst_7 [0] : vector<8x1xf32> to vector<1xf32>
    %34 = vector.shape_cast %33 : vector<1xf32> to vector<1x1xf32>
    %35 = vector.shape_cast %34 : vector<1x1xf32> to vector<1x1xf32>
    %36 = vector.broadcast %35 : vector<1x1xf32> to vector<8x128xf32>
    %c0_8 = arith.constant 0 : index
    %c0_9 = arith.constant 0 : index
    %c0_10 = arith.constant 0 : index
    %37 = vector.load %arg2[%c0_8, %c0_9, %c0_10] : memref<1x8x128xf32, #tpu.memory_space<vmem>>, vector<1x8x128xf32>
    %38 = vector.shape_cast %37 : vector<1x8x128xf32> to vector<8x128xf32>
    %39 = vector.shape_cast %36 : vector<8x128xf32> to vector<1x8x128xf32>
    tpu.vector_store %arg2[%c0_8, %c0_9, %c0_10], %39 {strides = array<i32>} : memref<1x8x128xf32, #tpu.memory_space<vmem>>, vector<1x8x128xf32>,
    %40 = arith.mulf %23, %23 : vector<8x256xf32>
    %cst_11 = arith.constant dense<0.000000e+00> : vector<8xf32>
    %41 = vector.multi_reduction <add>, %40, %cst_11 [1] : vector<8x256xf32> to vector<8xf32>
    %42 = vector.shape_cast %41 : vector<8xf32> to vector<8x1xf32>
    %cst_12 = arith.constant dense<0.000000e+00> : vector<1xf32>
    %43 = vector.multi_reduction <add>, %42, %cst_12 [0] : vector<8x1xf32> to vector<1xf32>
    %44 = vector.shape_cast %43 : vector<1xf32> to vector<1x1xf32>
    %45 = vector.shape_cast %44 : vector<1x1xf32> to vector<1x1xf32>
    %46 = vector.broadcast %45 : vector<1x1xf32> to vector<8x128xf32>
    %c0_13 = arith.constant 0 : index
    %c0_14 = arith.constant 0 : index
    %c0_15 = arith.constant 0 : index
    %47 = vector.load %arg3[%c0_13, %c0_14, %c0_15] : memref<1x8x128xf32, #tpu.memory_space<vmem>>, vector<1x8x128xf32>
    %48 = vector.shape_cast %47 : vector<1x8x128xf32> to vector<8x128xf32>
    %49 = vector.shape_cast %46 : vector<8x128xf32> to vector<1x8x128xf32>
    tpu.vector_store %arg3[%c0_13, %c0_14, %c0_15], %49 {strides = array<i32>} : memref<1x8x128xf32, #tpu.memory_space<vmem>>, vector<1x8x128xf32>,
    return
  }
  func.func @transform_0(%arg0: i32) -> (i32, i32) {
    %c0_i32 = arith.constant 0 : i32
    %c0_i32_0 = arith.constant 0 : i32
    return %arg0, %c0_i32 : i32, i32
  }
  func.func @transform_1(%arg0: i32) -> (i32, i32, i32) {
    %c0_i32 = arith.constant 0 : i32
    %c0_i32_0 = arith.constant 0 : i32
    %c0_i32_1 = arith.constant 0 : i32
    return %arg0, %c0_i32, %c0_i32_0 : i32, i32, i32
  }
  func.func @transform_2(%arg0: i32) -> (i32, i32, i32) {
    %c0_i32 = arith.constant 0 : i32
    %c0_i32_0 = arith.constant 0 : i32
    %c0_i32_1 = arith.constant 0 : i32
    return %arg0, %c0_i32, %c0_i32_0 : i32, i32, i32
  }
}

</mosaic_0001>

<llo_original>
// kernel: tpu_custom_call.1
$region0: #{tpu_custom_call.1}
  #allocation0 [shape = 'u32[]', space=smem, size = 0x4, offset = 0x4, fixed_abs, tag = 'smem constant byte address 0x4 - core index']
  #allocation1 [shape = 'u32[144,128]{1,0:T(1,128)}', space=vmem, size = 0x12000, scoped, tag = 'internal scratch']
  %s0 = inlined_call_operand.hbm [shape: f32[8,256], index: 0, kind: input, shape index: {}]
  %s1 = inlined_call_operand.hbm [shape: f32[1,8,128], index: 1, kind: output, shape index: {0}]
  %s2 = inlined_call_operand.hbm [shape: f32[1,8,128], index: 2, kind: output, shape index: {1}]
  %3 = xla_tuple %s1, %s2
  %s4 = sld [smem:[#allocation0]]
  $region26: #{tpu_custom_call.1} parent=0
    _
  %s6 = ssub.s32 1, %s4
  %s7 = scalar_select 0, %s6, %s4
  $region1: #{tpu_custom_call.1} parent=0
    #allocation2 [shape = 'u8[8192]{0}', space=vmem, size = 0x2000, scoped, tag = 'input window, operand 0, single buffered']
    #allocation3 [shape = 's32[1]{0}', space=sflag, size = 0x4, scoped, tag = 'scoped memory for tpu_custom_call.1']
    #allocation4 [shape = 's32[1]{0}', space=sflag, size = 0x4, scoped, tag = 'scoped memory for tpu_custom_call.1']
    #allocation5 [shape = 'u8[4096]{0}', space=vmem, size = 0x1000, scoped, tag = 'output window, operand 0, single buffered']
    #allocation6 [shape = 'u8[4096]{0}', space=vmem, size = 0x1000, scoped, tag = 'output window, operand 1, single buffered']
    #allocation7 [shape = 's32[1]{0}', space=sflag, size = 0x4, scoped, tag = 'scoped memory for tpu_custom_call.1']
    %8 = vsyncpa [#allocation3], 0
    %9 = vsyncpa [#allocation4], 0
    %10 = vsyncpa [#allocation7], 0
    // Predicated region
    $region2: #{tpu_custom_call.1} parent=1 // pred_check
      _
    $region3: #{tpu_custom_call.1} parent=1 // pred_check_branch
      %12 = sbr.rel (0) target = $region5
    $region4: #{tpu_custom_call.1} parent=1 // pred_region
      %s14 = ssub.s32 256, 256
      %15 = vsyncadd [#allocation3], %s14
      %s17 = sshll.u32 [#allocation2], 4
      %s18 = int_to_ptr.vmem [resolvable:$true] %s17
      %20 = dma.hbm_to_vmem [thread:$0]  %s0, 256, %s18, [#allocation3]
    $region5: #{tpu_custom_call.1} parent=1 // pred_fallthru
      _
    // Predicated region
    $region6: #{tpu_custom_call.1} parent=1 // pred_check
      _
    $region7: #{tpu_custom_call.1} parent=1 // pred_check_branch
      %22 = sbr.rel (0) target = $region9
    $region8: #{tpu_custom_call.1} parent=1 // pred_region
      %23 = dma.done [#allocation3], 256
    $region9: #{tpu_custom_call.1} parent=1 // pred_fallthru
      _
    %v24 = vld [vmem:[#allocation2] sm:$0xff]
    %v25 = vld [vmem:[#allocation2 + $0x8] sm:$0xff]
    %v26 = vlaneseq
    %v27 = vand.u32 %v26, 127
    %v28 = vadd.s32 %v27, 128
    %29 = vrot.lane.b32.xlu0 %v24, 127
    %v30 = vpop.permute.xlu0 %29
    %31 = vrot.lane.b32.xlu0 %v25, 127
    %v32 = vpop.permute.xlu0 %31
    %vm33 = vcmp.lt.s32.totalorder %v27, 127
    %v34 = vsel %vm33, %v30, %v32
    %v35 = vsel %vm33, %v32, %v30
    %vm36 = vcmp.lt.s32.totalorder %v27, 0
    %v37 = vsub.s32 0, %v27
    %v38 = vsel %vm36, %v37, %v27
    %v39 = vshrl.u32 %v38, 4
    %v40 = vand.u32 %v38, 15
    %v41 = vsub.s32 0, %v40
    %v42 = vsel %vm36, %v41, %v40
    %vm43 = vcmp.lt.s32.totalorder %v28, 0
    %v44 = vsub.s32 0, %v28
    %v45 = vsel %vm43, %v44, %v28
    %v46 = vshrl.u32 %v45, 4
    %v47 = vand.u32 %v45, 15
    %v48 = vsub.s32 0, %v47
    %v49 = vsel %vm43, %v48, %v47
    %vm50 = vcmp.ne.s32.totalorder %v42, 0
    %vm51 = vcmp.ne.s32.totalorder %v49, 0
    %vm52 = vcmp.lt.s32.totalorder %v42, 0
    %vm53 = vcmp.lt.s32.totalorder %v49, 0
    %vm54 = vmand %vm52, %vm50
    %vm55 = vmand %vm53, %vm51
    %v56 = vadd.s32 %v42, 16
    %v57 = vadd.s32 %v49, 16
    %v58 = vsel %vm54, %v56, %v42
    %v59 = vsel %vm55, %v57, %v49
    %vm60 = vcmp.ne.s32.totalorder %v58, 15
    %vm61 = vcmp.ne.s32.totalorder %v59, 15
    %v62 = vsub.f32 %v34, %v24
    %v63 = vsub.f32 %v35, %v25
    %v64 = vsel %vm60, %v62, 0.0
    %v65 = vsel %vm61, %v63, 0.0
    %66 = vrot.lane.b32.xlu0 %v24, 112
    %v67 = vpop.permute.xlu0 %66
    %68 = vrot.lane.b32.xlu0 %v25, 112
    %v69 = vpop.permute.xlu0 %68
    %vm70 = vcmp.lt.s32.totalorder %v27, 112
    %v71 = vsel %vm70, %v67, %v69
    %v72 = vsel %vm70, %v69, %v67
    %vm73 = vcmp.lt.s32.totalorder %v27, 240
    %vm74 = vcmp.lt.s32.totalorder %v28, 240
    %v75 = vsub.f32 %v71, %v24
    %v76 = vsub.f32 %v72, %v25
    %v77 = vsel %vm73, %v75, 0.0
    %v78 = vsel %vm74, %v76, 0.0
    %v79 = vmul.f32 %v77, %v77
    %v80 = vmul.f32 %v78, %v78
    %v81 = vadd.f32 %v79, %v80
    %82 = vadd.xlane.f32.xlu0 %v81
    %v83 = vpop.xlane.xlu0 %82
    %v84 = vrot.slane %v83, 4
    %v85 = vadd.f32 %v83, %v84
    %v86 = vrot.slane %v85, 2
    %v87 = vadd.f32 %v85, %v86
    %v88 = vrot.slane %v87, 1
    %v89 = vadd.f32 %v87, %v88
    %90 = vst [vmem:[#allocation5] sm:$0xff] %v89
    %v91 = vmul.f32 %v64, %v64
    %v92 = vmul.f32 %v65, %v65
    %v93 = vadd.f32 %v91, %v92
    %94 = vadd.xlane.f32.xlu0 %v93
    %v95 = vpop.xlane.xlu0 %94
    %v96 = vrot.slane %v95, 4
    %v97 = vadd.f32 %v95, %v96
    %v98 = vrot.slane %v97, 2
    %v99 = vadd.f32 %v97, %v98
    %v100 = vrot.slane %v99, 1
    %v101 = vadd.f32 %v99, %v100
    %102 = vst [vmem:[#allocation6] sm:$0xff] %v101
    // Predicated region
    $region10: #{tpu_custom_call.1} parent=1 // pred_check
      _
    $region11: #{tpu_custom_call.1} parent=1 // pred_check_branch
      %104 = sbr.rel (0) target = $region13
    $region12: #{tpu_custom_call.1} parent=1 // pred_region
      %s106 = ssub.s32 128, 128
      %107 = vsyncadd [#allocation4], %s106
      %s109 = sshll.u32 [#allocation5], 4
      %s110 = int_to_ptr.vmem [resolvable:$true] %s109
      %112 = dma.vmem_to_hbm [thread:$0]  %s110, 128, %s1, [#allocation4]
    $region13: #{tpu_custom_call.1} parent=1 // pred_fallthru
      _
    // Predicated region
    $region14: #{tpu_custom_call.1} parent=1 // pred_check
      _
    $region15: #{tpu_custom_call.1} parent=1 // pred_check_branch
      %114 = sbr.rel (0) target = $region17
    $region16: #{tpu_custom_call.1} parent=1 // pred_region
      %s116 = ssub.s32 128, 128
      %117 = vsyncadd [#allocation7], %s116
      %s119 = sshll.u32 [#allocation6], 4
      %s120 = int_to_ptr.vmem [resolvable:$true] %s119
      %122 = dma.vmem_to_hbm [thread:$0]  %s120, 128, %s2, [#allocation7]
    $region17: #{tpu_custom_call.1} parent=1 // pred_fallthru
      _
    // Predicated region
    $region18: #{tpu_custom_call.1} parent=1 // pred_check
      _
    $region19: #{tpu_custom_call.1} parent=1 // pred_check_branch
      %124 = sbr.rel (0) target = $region21
    $region20: #{tpu_custom_call.1} parent=1 // pred_region
      %125 = dma.done [#allocation4], 128
    $region21: #{tpu_custom_call.1} parent=1 // pred_fallthru
      _
    // Predicated region
    $region22: #{tpu_custom_call.1} parent=1 // pred_check
      _
    $region23: #{tpu_custom_call.1} parent=1 // pred_check_branch
      %127 = sbr.rel (0) target = $region25
    $region24: #{tpu_custom_call.1} parent=1 // pred_region
      %128 = dma.done [#allocation7], 128
    $region25: #{tpu_custom_call.1} parent=1 // pred_fallthru
      _
    %129 = vsyncpa [#allocation3], 1
    %130 = vsyncpa [#allocation4], 1
    %131 = vsyncpa [#allocation7], 1

</llo_original>
